<compile_context>
chip_gen: v5e
topology: v5e:2x2
jax: 0.10.0
libtpu: 0.0.40
codegen_flags: <defaults>
</compile_context>

<pallas_src>
import functools

import numpy as np

import jax
import jax.numpy as jnp
from jax.experimental import pallas as pl
from jax.experimental.pallas import tpu as pltpu


_BIG = 1e30  # large finite sentinel (NOT inf: inf - inf would give NaN)


def _round_up(x, m):
    return ((x + m - 1) // m) * m


# --------------------------------------------------------------------------
# Pallas kernel: one anchor block per grid step.
# --------------------------------------------------------------------------
def _triplet_reg_kernel(wa_ref, wpos_ref, wt_ref, gida_ref, gidp_ref, gidc_ref,
                        o_ref, *, margin, eps, d_chunks, tn):
    """Per-(anchor, positive-window) partial sums over all negatives.

    trip[a, p, n] = relu(d1(a, p) - d1(a, n) + margin), with
    d1(x, y) = sum_d |x_d - y_d + eps|   (torch.pairwise_distance, p=1).
    Valid triplets: group(a) == group(p), group(n) != group(a), all rows real.
    Masks and the +margin are folded into the distance matrices via +/-BIG
    sentinels, so the O(N^3) work is only: subtract + relu + lane reduce,
    chunked over the negative (lane) axis so it stays in vregs.
    """
    f32 = jnp.float32
    wa = wa_ref[...].astype(f32)                     # [TA, D]   anchor block
    wpos = wpos_ref[0].astype(f32)                   # [PW, D]   positive window
    gid_a = gida_ref[...]                            # [TA, 1]   int32 (-2 = pad)
    gid_p = gidp_ref[0]                              # [1, PW]   int32 (-1 = pad)
    gid_c = gidc_ref[...]                            # [1, NP]   int32 (-1 = pad)

    ta = wa.shape[0]
    n_pad = wt_ref.shape[1]
    pw = wpos.shape[0]

    # ---- lane-dense anchor -> all-rows L1 distances, accumulated over
    # D-chunks so the [TA, dc, NP] intermediate stays small for any D.
    dmat = jnp.zeros((ta, n_pad), f32)
    for d0, d1 in d_chunks:
        wt_c = wt_ref[d0:d1, :].astype(f32)                      # [dc, NP]
        diff = wa[:, d0:d1, None] - wt_c[None, :, :] + eps       # [TA, dc, NP]
        dmat = dmat + jnp.sum(jnp.abs(diff), axis=1)             # [TA, NP]

    # ---- anchor -> positive-window L1 distances (tiny: PW and D both small).
    diff_p = wa[:, None, :] - wpos[None, :, :] + eps             # [TA, PW, D]
    d_ap_raw = jnp.sum(jnp.abs(diff_p), axis=-1)                 # [TA, PW]

    # ---- masks + margin folded in at O(N^2):
    #   invalid / non-group (a, p) pairs -> -BIG  => relu(...) == 0
    #   invalid / same-group (a, n) pairs -> +BIG => relu(...) == 0
    d_ap = jnp.where(gid_a == gid_p, d_ap_raw + margin, -_BIG)   # [TA, PW]
    neg_ok = jnp.logical_and(gid_c >= 0, gid_a != gid_c)         # [TA, NP]
    d_an = jnp.where(neg_ok, dmat, _BIG)                         # [TA, NP]

    # ---- O(N^3) phase, chunked over the negative (lane) axis: each
    # [TA, PW, TN] chunk lives in vregs and feeds a [TA, PW] accumulator.
    d_ap_b = d_ap[:, :, None]                                    # [TA, PW, 1]
    acc = jnp.zeros((ta, pw), f32)
    for c0 in range(0, n_pad, tn):
        d_an_c = d_an[:, c0:c0 + tn]                             # [TA, TN]
        trip = jnp.maximum(d_ap_b - d_an_c[:, None, :], 0.0)     # [TA, PW, TN]
        acc = acc + jnp.sum(trip, axis=2)
    o_ref[...] = acc


def depth_embed_regularization_pallas(weight, num_group_members=5, margin=1.0,
                                      p=1, eps=1e-6):
    """JAX/Pallas equivalent of Regularization.depth_embed_regularization."""
    assert p == 1, "kernel implements the module default p=1 (L1 distance)"
    n_rows, dim = weight.shape
    gs = int(num_group_members)

    # ---- role-specific padding ------------------------------------------
    # negatives (reduction / lane axis): multiple of 128
    n_pad = max(128, _round_up(n_rows, 128))
    # anchors: block_a rows per grid step; >=2 "parallel" blocks whenever N>8
    block_a = min(64, max(8, _round_up(-(-n_rows // 8), 8)))
    num_blocks = -(-n_rows // block_a)
    a_pad = num_blocks * block_a
    # positives: per-block group window, multiple of 8 (NOT padded to 128)
    p_win = min(_round_up(block_a + 2 * (gs - 1), 8), _round_up(n_rows, 8))

    # Bound per-step transients to ~2 MiB (safe inside every generation's
    # scoped-VMEM default, incl. v7x's 64 MiB physical VMEM).
    budget = 2 * 1024 * 1024
    dc = dim
    if block_a * dim * n_pad * 4 > budget:
        dc = max(8, (budget // (block_a * n_pad * 4)) // 8 * 8)
    d_chunks = tuple((d0, min(d0 + dc, dim)) for d0 in range(0, dim, dc))

    tn = 128
    for cand in (512, 256, 128):
        if n_pad % cand == 0 and block_a * p_win * cand * 4 <= budget:
            tn = cand
            break

    # ---- wrapper-side (one-off) input prep -------------------------------
    dt = weight.dtype
    w_anch = jnp.zeros((a_pad, dim), dtype=dt).at[:n_rows].set(weight)
    w_t = jnp.zeros((dim, n_pad), dtype=dt).at[:, :n_rows].set(weight.T)

    rows = np.arange(n_pad)
    gid_col = np.where(rows < n_rows, rows // gs, -1).astype(np.int32)[None, :]
    a_rows = np.arange(a_pad)
    gid_anc = np.where(a_rows < n_rows, a_rows // gs, -2).astype(np.int32)[:, None]

    # Per-block positive window: rows [p_start_i, p_start_i + p_win), where
    # p_start_i is the group start of the block's first anchor.
    p_starts = (np.arange(num_blocks) * block_a) // gs * gs
    win_idx = p_starts[:, None] + np.arange(p_win)[None, :]         # [NB, PW]
    pad_rows = max(int(win_idx.max()) + 1, n_rows)
    gid_vec = np.where(np.arange(pad_rows) < n_rows,
                       np.arange(pad_rows) // gs, -1).astype(np.int32)
    pos_gid = gid_vec[win_idx][:, None, :]                          # [NB, 1, PW]
    w_rows = jnp.zeros((pad_rows, dim), dtype=dt).at[:n_rows].set(weight)
    pos_w = jnp.take(w_rows, jnp.asarray(win_idx), axis=0)          # [NB, PW, D]

    kernel = functools.partial(_triplet_reg_kernel, margin=float(margin),
                               eps=float(eps), d_chunks=d_chunks, tn=tn)

    isz = jnp.dtype(dt).itemsize
    cost = pl.CostEstimate(
        flops=int(3 * a_pad * p_win * n_pad + 3 * a_pad * n_pad * dim
                  + 3 * a_pad * p_win * dim),
        transcendentals=0,
        bytes_accessed=int((a_pad * dim + dim * n_pad
                            + num_blocks * p_win * dim) * isz
                           + a_pad * p_win * 4))

    partials = pl.pallas_call(
        kernel,
        grid=(num_blocks,),
        in_specs=[
            pl.BlockSpec((block_a, dim), lambda i: (i, 0)),        # anchor block
            pl.BlockSpec((1, p_win, dim), lambda i: (i, 0, 0)),    # positive window
            pl.BlockSpec((dim, n_pad), lambda i: (0, 0)),          # transposed table
            pl.BlockSpec((block_a, 1), lambda i: (i, 0)),          # anchor group ids
            pl.BlockSpec((1, 1, p_win), lambda i: (i, 0, 0)),      # window group ids
            pl.BlockSpec((1, n_pad), lambda i: (0, 0)),            # column group ids
        ],
        out_specs=pl.BlockSpec((block_a, p_win), lambda i: (i, 0)),
        out_shape=jax.ShapeDtypeStruct((a_pad, p_win), jnp.float32),
        compiler_params=pltpu.CompilerParams(
            dimension_semantics=("parallel",),
            vmem_limit_bytes=32 * 1024 * 1024),
        cost_estimate=cost,
    )(w_anch, pos_w, w_t, jnp.asarray(gid_anc), jnp.asarray(pos_gid),
      jnp.asarray(gid_col))

    # Per-(anchor, positive) partials summed in plain JAX (padded entries are
    # exact zeros because their d_ap was forced to -BIG).
    total = jnp.sum(partials)

    # num_samples accumulated exactly as the PyTorch group loop does.
    num_samples = 0
    for i in range(0, n_rows, gs):
        g = min(gs, n_rows - i)
        num_samples += g * g * (n_rows - g)

    return total / jnp.float32(num_samples)


# --------------------------------------------------------------------------
# Pure-JAX reference (mirrors the PyTorch loop) for a correctness check.
# --------------------------------------------------------------------------
def _depth_embed_regularization_ref(weight, num_group_members=5, margin=1.0,
                                    eps=1e-6):
    n_rows = weight.shape[0]
    loss = 0.0
    num_samples = 0
    for i in range(0, n_rows, num_group_members):
        grp = weight[i:i + num_group_members]
        neg = jnp.concatenate([weight[:i], weight[i + num_group_members:]], axis=0)
        d_ap = jnp.sum(jnp.abs(grp[:, None, :] - grp[None, :, :] + eps), axis=-1)
        d_an = jnp.sum(jnp.abs(grp[:, None, :] - neg[None, :, :] + eps), axis=-1)
        trip = jnp.maximum(d_ap[:, :, None] - d_an[:, None, :] + margin, 0.0)
        loss = loss + jnp.sum(trip)
        num_samples += grp.shape[0] * grp.shape[0] * neg.shape[0]
    return loss / num_samples


# --------------------------------------------------------------------------
# Regularization module (forward pass) on top of the Pallas kernel.
# --------------------------------------------------------------------------
class Regularization:
    def __init__(self, loss_names, weight_dict, loss_args=None):
        self.loss_names = loss_names
        self.weight_dict = weight_dict
        self.loss_args = loss_args or {}
        self.loss_functions = {
            "depth_embed_regularization": self._depth_embed_regularization,
        }
        assert len(self.weight_dict) == len(self.loss_names)

    @staticmethod
    def _depth_embed_regularization(model, num_group_members=5, margin=1.0, p=1):
        w = model.depth_predictor.depth_pos_embed.weight
        return depth_embed_regularization_pallas(
            w, num_group_members=num_group_members, margin=margin, p=p)

    def get_loss(self, loss_name, model):
        assert loss_name in self.loss_functions
        return self.loss_functions[loss_name](model,
                                              **self.loss_args.get(loss_name, {}))

    def forward(self, model):
        loss_dict, unweighted_log = {}, {}
        for name in self.loss_names:
            loss = self.get_loss(name, model)
            unweighted_log[name] = loss
            loss_dict[name] = loss * self.weight_dict[name]
        # TODO(synk): misc.reduce_dict is a multi-process all-reduce/average;
        # single-device here, so it is an identity.
        unweighted_log = {k: float(v) for k, v in unweighted_log.items()}
        return loss_dict, unweighted_log

    __call__ = forward


# Tiny stand-in "model" holding depth_predictor.depth_pos_embed.weight
class _Embed:
    def __init__(self, weight):
        self.weight = weight


class _DepthPredictor:
    def __init__(self, weight):
        self.depth_pos_embed = _Embed(weight)


class _Model:
    def __init__(self, weight):
        self.depth_predictor = _DepthPredictor(weight)


# --------------------------------------------------------------------------
if __name__ == "__main__":
    key = jax.random.PRNGKey(0)
    # Embedding table: 40 rows (8 groups of 5), embed dim 32.
    N, D = 40, 32
    weight = jax.random.normal(key, (N, D), dtype=jnp.float32)
    model = _Model(weight)

    reg = Regularization(
        loss_names=["depth_embed_regularization"],
        weight_dict={"depth_embed_regularization": 0.1},
        loss_args={"depth_embed_regularization":
                   {"num_group_members": 5, "margin": 1.0, "p": 1}},
    )

    loss_dict, unweighted_log = reg(model)
    jax.block_until_ready(loss_dict["depth_embed_regularization"])

    # Correctness check against the pure-JAX reference of the PyTorch loop.
    ref = _depth_embed_regularization_ref(weight, num_group_members=5, margin=1.0)
    ref = jax.block_until_ready(ref)
    assert jnp.allclose(unweighted_log["depth_embed_regularization"], ref,
                        rtol=5e-4, atol=1e-5), (
        unweighted_log["depth_embed_regularization"], float(ref))

    # Second config exercising a ragged last group / non-power-of-2 group size.
    key2 = jax.random.PRNGKey(1)
    weight2 = jax.random.normal(key2, (23, 32), dtype=jnp.float32)
    out2 = jax.block_until_ready(
        depth_embed_regularization_pallas(weight2, num_group_members=4,
                                          margin=0.5))
    ref2 = jax.block_until_ready(
        _depth_embed_regularization_ref(weight2, num_group_members=4,
                                        margin=0.5))
    assert jnp.allclose(out2, ref2, rtol=5e-4, atol=1e-5), (float(out2),
                                                            float(ref2))

    print("KERNEL_OK")
</pallas_src>

<mosaic_0001>
module attributes {stable_mosaic.version = 11 : i64} {
  func.func @_triplet_reg_kernel(%arg0: i32, %arg1: memref<8x32xf32, #tpu.memory_space<vmem>>, %arg2: memref<1x16x32xf32, #tpu.memory_space<vmem>>, %arg3: memref<32x128xf32, #tpu.memory_space<vmem>>, %arg4: memref<8x1xi32, #tpu.memory_space<vmem>>, %arg5: memref<1x1x16xi32, #tpu.memory_space<vmem>>, %arg6: memref<1x128xi32, #tpu.memory_space<vmem>>, %arg7: memref<8x16xf32, #tpu.memory_space<vmem>>) attributes {dimension_semantics = [#tpu.dimension_semantics<parallel>], iteration_bounds = array<i64: 5>, scalar_prefetch = 0 : i64, scratch_operands = 0 : i64, tpu.core_type = #tpu.core_type<tc>, window_params = [{transform_indices = @transform_0, window_bounds = array<i64: 8, 32>}, {transform_indices = @transform_1, window_bounds = array<i64: 1, 16, 32>}, {pipeline_mode = #tpu.pipeline_mode<synchronous>, transform_indices = @transform_2, window_bounds = array<i64: 32, 128>}, {transform_indices = @transform_3, window_bounds = array<i64: 8, 1>}, {transform_indices = @transform_4, window_bounds = array<i64: 1, 1, 16>}, {pipeline_mode = #tpu.pipeline_mode<synchronous>, transform_indices = @transform_5, window_bounds = array<i64: 1, 128>}, {transform_indices = @transform_6, window_bounds = array<i64: 8, 16>}]} {
    %c0 = arith.constant 0 : index
    %c0_0 = arith.constant 0 : index
    %0 = vector.load %arg1[%c0, %c0_0] : memref<8x32xf32, #tpu.memory_space<vmem>>, vector<8x32xf32>
    %c0_1 = arith.constant 0 : index
    %c0_2 = arith.constant 0 : index
    %c0_3 = arith.constant 0 : index
    %1 = vector.load %arg2[%c0_1, %c0_2, %c0_3] : memref<1x16x32xf32, #tpu.memory_space<vmem>>, vector<1x16x32xf32>
    %2 = vector.shape_cast %1 : vector<1x16x32xf32> to vector<16x32xf32>
    %c0_4 = arith.constant 0 : index
    %c0_5 = arith.constant 0 : index
    %3 = vector.load %arg4[%c0_4, %c0_5] : memref<8x1xi32, #tpu.memory_space<vmem>>, vector<8x1xi32>
    %c0_6 = arith.constant 0 : index
    %c0_7 = arith.constant 0 : index
    %c0_8 = arith.constant 0 : index
    %4 = vector.load %arg5[%c0_6, %c0_7, %c0_8] : memref<1x1x16xi32, #tpu.memory_space<vmem>>, vector<1x1x16xi32>
    %5 = vector.shape_cast %4 : vector<1x1x16xi32> to vector<1x16xi32>
    %c0_9 = arith.constant 0 : index
    %c0_10 = arith.constant 0 : index
    %6 = vector.load %arg6[%c0_9, %c0_10] : memref<1x128xi32, #tpu.memory_space<vmem>>, vector<1x128xi32>
    %cst = arith.constant 0.000000e+00 : f32
    %7 = vector.broadcast %cst : f32 to vector<8x128xf32>
    %c0_11 = arith.constant 0 : index
    %c0_12 = arith.constant 0 : index
    %8 = vector.load %arg3[%c0_11, %c0_12] : memref<32x128xf32, #tpu.memory_space<vmem>>, vector<32x128xf32>
    %9 = vector.shape_cast %0 : vector<8x32xf32> to vector<8x32x1xf32>
    %10 = vector.shape_cast %8 : vector<32x128xf32> to vector<1x32x128xf32>
    %11 = vector.broadcast %9 : vector<8x32x1xf32> to vector<8x32x128xf32>
    %12 = vector.broadcast %10 : vector<1x32x128xf32> to vector<8x32x128xf32>
    %13 = arith.subf %11, %12 : vector<8x32x128xf32>
    %cst_13 = arith.constant 9.99999997E-7 : f32
    %14 = vector.broadcast %cst_13 : f32 to vector<8x32x128xf32>
    %15 = arith.addf %13, %14 : vector<8x32x128xf32>
    %16 = math.absf %15 : vector<8x32x128xf32>
    %cst_14 = arith.constant dense<0.000000e+00> : vector<8x128xf32>
    %17 = vector.multi_reduction <add>, %16, %cst_14 [1] : vector<8x32x128xf32> to vector<8x128xf32>
    %18 = arith.addf %7, %17 : vector<8x128xf32>
    %19 = vector.shape_cast %0 : vector<8x32xf32> to vector<8x1x32xf32>
    %20 = vector.shape_cast %2 : vector<16x32xf32> to vector<1x16x32xf32>
    %21 = vector.broadcast %19 : vector<8x1x32xf32> to vector<8x16x32xf32>
    %22 = vector.broadcast %20 : vector<1x16x32xf32> to vector<8x16x32xf32>
    %23 = arith.subf %21, %22 : vector<8x16x32xf32>
    %cst_15 = arith.constant 9.99999997E-7 : f32
    %24 = vector.broadcast %cst_15 : f32 to vector<8x16x32xf32>
    %25 = arith.addf %23, %24 : vector<8x16x32xf32>
    %26 = math.absf %25 : vector<8x16x32xf32>
    %cst_16 = arith.constant dense<0.000000e+00> : vector<8x16xf32>
    %27 = vector.multi_reduction <add>, %26, %cst_16 [2] : vector<8x16x32xf32> to vector<8x16xf32>
    %28 = vector.broadcast %3 : vector<8x1xi32> to vector<8x16xi32>
    %29 = vector.broadcast %5 : vector<1x16xi32> to vector<8x16xi32>
    %30 = arith.cmpi eq, %28, %29 : vector<8x16xi32>
    %cst_17 = arith.constant 1.000000e+00 : f32
    %31 = vector.broadcast %cst_17 : f32 to vector<8x16xf32>
    %32 = arith.addf %27, %31 : vector<8x16xf32>
    %cst_18 = arith.constant -1.000000e+30 : f32
    %33 = vector.broadcast %cst_18 : f32 to vector<8x16xf32>
    %34 = arith.select %30, %32, %33 : vector<8x16xi1>, vector<8x16xf32>
    %c0_i32 = arith.constant 0 : i32
    %35 = vector.broadcast %c0_i32 : i32 to vector<1x128xi32>
    %36 = arith.cmpi sge, %6, %35 : vector<1x128xi32>
    %37 = vector.broadcast %3 : vector<8x1xi32> to vector<8x128xi32>
    %38 = vector.broadcast %6 : vector<1x128xi32> to vector<8x128xi32>
    %39 = arith.cmpi ne, %37, %38 : vector<8x128xi32>
    %40 = vector.broadcast %36 : vector<1x128xi1> to vector<8x128xi1>
    %41 = arith.andi %40, %39 : vector<8x128xi1>
    %cst_19 = arith.constant 1.000000e+30 : f32
    %42 = vector.broadcast %cst_19 : f32 to vector<8x128xf32>
    %43 = arith.select %41, %18, %42 : vector<8x128xi1>, vector<8x128xf32>
    %44 = vector.shape_cast %34 : vector<8x16xf32> to vector<8x16x1xf32>
    %cst_20 = arith.constant 0.000000e+00 : f32
    %45 = vector.broadcast %cst_20 : f32 to vector<8x16xf32>
    %46 = vector.shape_cast %43 : vector<8x128xf32> to vector<8x1x128xf32>
    %47 = vector.broadcast %44 : vector<8x16x1xf32> to vector<8x16x128xf32>
    %48 = vector.broadcast %46 : vector<8x1x128xf32> to vector<8x16x128xf32>
    %49 = arith.subf %47, %48 : vector<8x16x128xf32>
    %cst_21 = arith.constant 0.000000e+00 : f32
    %50 = vector.broadcast %cst_21 : f32 to vector<8x16x128xf32>
    %51 = arith.maximumf %49, %50 : vector<8x16x128xf32>
    %cst_22 = arith.constant dense<0.000000e+00> : vector<8x16xf32>
    %52 = vector.multi_reduction <add>, %51, %cst_22 [2] : vector<8x16x128xf32> to vector<8x16xf32>
    %53 = arith.addf %45, %52 : vector<8x16xf32>
    %c0_23 = arith.constant 0 : index
    %c0_24 = arith.constant 0 : index
    %54 = vector.load %arg7[%c0_23, %c0_24] : memref<8x16xf32, #tpu.memory_space<vmem>>, vector<8x16xf32>
    tpu.vector_store %arg7[%c0_23, %c0_24], %53 {strides = array<i32>} : memref<8x16xf32, #tpu.memory_space<vmem>>, vector<8x16xf32>,
    return
  }
  func.func @transform_0(%arg0: i32) -> (i32, i32) {
    %c0_i32 = arith.constant 0 : i32
    %c0_i32_0 = arith.constant 0 : i32
    return %arg0, %c0_i32 : i32, i32
  }
  func.func @transform_1(%arg0: i32) -> (i32, i32, i32) {
    %c0_i32 = arith.constant 0 : i32
    %c0_i32_0 = arith.constant 0 : i32
    %c0_i32_1 = arith.constant 0 : i32
    return %arg0, %c0_i32, %c0_i32_0 : i32, i32, i32
  }
  func.func @transform_2(%arg0: i32) -> (i32, i32) {
    %c0_i32 = arith.constant 0 : i32
    %c0_i32_0 = arith.constant 0 : i32
    %c0_i32_1 = arith.constant 0 : i32
    return %c0_i32, %c0_i32_0 : i32, i32
  }
  func.func @transform_3(%arg0: i32) -> (i32, i32) {
    %c0_i32 = arith.constant 0 : i32
    %c0_i32_0 = arith.constant 0 : i32
    return %arg0, %c0_i32 : i32, i32
  }
  func.func @transform_4(%arg0: i32) -> (i32, i32, i32) {
    %c0_i32 = arith.constant 0 : i32
    %c0_i32_0 = arith.constant 0 : i32
    %c0_i32_1 = arith.constant 0 : i32
    return %arg0, %c0_i32, %c0_i32_0 : i32, i32, i32
  }
  func.func @transform_5(%arg0: i32) -> (i32, i32) {
    %c0_i32 = arith.constant 0 : i32
    %c0_i32_0 = arith.constant 0 : i32
    %c0_i32_1 = arith.constant 0 : i32
    return %c0_i32, %c0_i32_0 : i32, i32
  }
  func.func @transform_6(%arg0: i32) -> (i32, i32) {
    %c0_i32 = arith.constant 0 : i32
    %c0_i32_0 = arith.constant 0 : i32
    return %arg0, %c0_i32 : i32, i32
  }
}

</mosaic_0001>

<llo_original>
// kernel: tpu_custom_call.1
$region0: #{tpu_custom_call.1}
  #allocation0 [shape = 'u32[]', space=smem, size = 0x4, offset = 0x4, fixed_abs, tag = 'smem constant byte address 0x4 - core index']
  #allocation1 [shape = 'u32[72,128]{1,0:T(1,128)}', space=vmem, size = 0x9000, scoped, tag = 'internal scratch']
  %s0 = inlined_call_operand.vmem [shape: f32[40,32], index: 0, kind: input, shape index: {}]
  %s1 = inlined_call_operand.vmem [shape: f32[5,16,32], index: 1, kind: input, shape index: {}]
  %s2 = inlined_call_operand.vmem [shape: f32[32,128], index: 2, kind: input, shape index: {}]
  %s3 = inlined_call_operand.vmem [shape: s32[40,1], index: 3, kind: input, shape index: {}]
  %s4 = inlined_call_operand.hbm [shape: s32[5,1,16], index: 4, kind: input, shape index: {}]
  %s5 = inlined_call_operand.vmem [shape: s32[1,128], index: 5, kind: input, shape index: {}]
  %s6 = inlined_call_operand.vmem [shape: f32[40,16], index: 6, kind: output, shape index: {}]
  %s7 = sld [smem:[#allocation0]]
  $region61: #{tpu_custom_call.1} parent=0
    _
  %s9 = ssub.s32 1, %s7
  %s10 = scalar_select 0, %s9, %s7
  $region1: #{tpu_custom_call.1} parent=0
    #allocation2 [shape = 'u8[1024]{0}', space=vmem, size = 0x400, scoped, tag = 'input window, operand 4']
    #allocation3 [shape = 's32[2]{0}', space=sflag, size = 0x8, scoped, tag = 'scoped memory for tpu_custom_call.1']
    %11 = vsyncpa [#allocation3], 0
    %s12 = scalar_lea.sflag [#allocation3], 1
    %13 = vsyncpa %s12, 0
    loop: start=0, step=1, limit=7
    $region2: #{tpu_custom_call.1} parent=1 // loop_pre_header
      _
    $region3: #{tpu_custom_call.1} parent=1 // loop_header
      %s15 = sphi 0, %s19
      %p16 = scmp.ge.s32.totalorder %s15, 7
      %s25 = sphi 0, %s27
      %s28 = sphi 0, %s25
      %s29 = sphi 0, %s28
      %s45 = sphi 0, %s29
      %s51 = sphi 0, %s53
      %s54 = sphi 0, %s51
      %s55 = sphi 0, %s54
      %s71 = sphi 0, %s55
      %s75 = sphi 0, %s75
      %s77 = sphi 0, %s75
      %s78 = sphi 0, %s77
      %s92 = sphi 0, %s78
      %s98 = sphi 0, %s100
      %s101 = sphi 0, %s98
      %s102 = sphi 0, %s101
      %s118 = sphi 0, %s102
      %s124 = sphi 0, %s126
      %s127 = sphi 0, %s124
      %s128 = sphi 0, %s127
      %s144 = sphi 0, %s128
      %s148 = sphi 0, %s148
      %s150 = sphi 0, %s148
      %s151 = sphi 0, %s150
      %s165 = sphi 0, %s151
      %s171 = sphi 0, %s173
      %s174 = sphi 0, %s171
      %s175 = sphi 0, %s174
      %s191 = sphi 0, %s175
    $region4: #{tpu_custom_call.1} parent=1 // loop_header_branch
      %18 = sbr.rel (%p16) target = $region8
    $region5: #{tpu_custom_call.1} parent=1 // loop_body
      %s20 = ssub.s32 %s15, 1
      %s21 = ssub.s32 %s15, 2
      %s22 = sadd.s32 %s15, 1
      %s23 = ssub.s32 %s15, %s22
      %p24 = scmp.eq.s32.totalorder %s23, 0
      %s26 = sadd.s32 %s25, 1
      %s27 = scalar_select %p24, %s25, %s26
      %p30 = pneg %p24
      %p31 = scmp.eq.s32.totalorder %s15, 4
      %p32 = por %p30, %p31
      %p33 = scmp.ne.s32.totalorder %s25, %s28
      %p34 = scmp.eq.s32.totalorder %s15, 0
      %p35 = por %p33, %p34
      %p36 = scmp.ne.s32.totalorder %s25, %s28
      %p37 = scmp.eq.s32.totalorder %s20, 4
      %p38 = por %p36, %p37
      %p39 = scmp.ne.s32.totalorder %s28, %s29
      %p40 = scmp.eq.s32.totalorder %s20, 0
      %p41 = por %p39, %p40
      %p42 = scmp.ne.s32.totalorder %s28, %s29
      %p43 = scmp.eq.s32.totalorder %s21, 4
      %p44 = por %p42, %p43
      %p46 = scmp.ne.s32.totalorder %s29, %s45
      %p47 = scmp.eq.s32.totalorder %s21, 0
      %p48 = por %p46, %p47
      %s49 = ssub.s32 %s15, %s22
      %p50 = scmp.eq.s32.totalorder %s49, 0
      %s52 = sadd.s32 %s51, 1
      %s53 = scalar_select %p50, %s51, %s52
      %p56 = pneg %p50
      %p57 = scmp.eq.s32.totalorder %s15, 4
      %p58 = por %p56, %p57
      %p59 = scmp.ne.s32.totalorder %s51, %s54
      %p60 = scmp.eq.s32.totalorder %s15, 0
      %p61 = por %p59, %p60
      %p62 = scmp.ne.s32.totalorder %s51, %s54
      %p63 = scmp.eq.s32.totalorder %s20, 4
      %p64 = por %p62, %p63
      %p65 = scmp.ne.s32.totalorder %s54, %s55
      %p66 = scmp.eq.s32.totalorder %s20, 0
      %p67 = por %p65, %p66
      %p68 = scmp.ne.s32.totalorder %s54, %s55
      %p69 = scmp.eq.s32.totalorder %s21, 4
      %p70 = por %p68, %p69
      %p72 = scmp.ne.s32.totalorder %s55, %s71
      %p73 = scmp.eq.s32.totalorder %s21, 0
      %p74 = por %p72, %p73
      %s76 = sadd.s32 %s75, 1
      %p79 = scmp.eq.s32.totalorder %s15, 4
      %p80 = scmp.ne.s32.totalorder %s75, %s77
      %p81 = scmp.eq.s32.totalorder %s15, 0
      %p82 = por %p80, %p81
      %p83 = scmp.ne.s32.totalorder %s75, %s77
      %p84 = scmp.eq.s32.totalorder %s20, 4
      %p85 = por %p83, %p84
      %p86 = scmp.ne.s32.totalorder %s77, %s78
      %p87 = scmp.eq.s32.totalorder %s20, 0
      %p88 = por %p86, %p87
      %p89 = scmp.ne.s32.totalorder %s77, %s78
      %p90 = scmp.eq.s32.totalorder %s21, 4
      %p91 = por %p89, %p90
      %p93 = scmp.ne.s32.totalorder %s78, %s92
      %p94 = scmp.eq.s32.totalorder %s21, 0
      %p95 = por %p93, %p94
      %s96 = ssub.s32 %s15, %s22
      %p97 = scmp.eq.s32.totalorder %s96, 0
      %s99 = sadd.s32 %s98, 1
      %s100 = scalar_select %p97, %s98, %s99
      %p103 = pneg %p97
      %p104 = scmp.eq.s32.totalorder %s15, 4
      %p105 = por %p103, %p104
      %p106 = scmp.ne.s32.totalorder %s98, %s101
      %p107 = scmp.eq.s32.totalorder %s15, 0
      %p108 = por %p106, %p107
      %p109 = scmp.ne.s32.totalorder %s98, %s101
      %p110 = scmp.eq.s32.totalorder %s20, 4
      %p111 = por %p109, %p110
      %p112 = scmp.ne.s32.totalorder %s101, %s102
      %p113 = scmp.eq.s32.totalorder %s20, 0
      %p114 = por %p112, %p113
      %p115 = scmp.ne.s32.totalorder %s101, %s102
      %p116 = scmp.eq.s32.totalorder %s21, 4
      %p117 = por %p115, %p116
      %p119 = scmp.ne.s32.totalorder %s102, %s118
      %p120 = scmp.eq.s32.totalorder %s21, 0
      %p121 = por %p119, %p120
      %s122 = ssub.s32 %s15, %s22
      %p123 = scmp.eq.s32.totalorder %s122, 0
      %s125 = sadd.s32 %s124, 1
      %s126 = scalar_select %p123, %s124, %s125
      %p129 = pneg %p123
      %p130 = scmp.eq.s32.totalorder %s15, 4
      %p131 = por %p129, %p130
      %p132 = scmp.ne.s32.totalorder %s124, %s127
      %p133 = scmp.eq.s32.totalorder %s15, 0
      %p134 = por %p132, %p133
      %p135 = scmp.ne.s32.totalorder %s124, %s127
      %p136 = scmp.eq.s32.totalorder %s20, 4
      %p137 = por %p135, %p136
      %p138 = scmp.ne.s32.totalorder %s127, %s128
      %p139 = scmp.eq.s32.totalorder %s20, 0
      %p140 = por %p138, %p139
      %p141 = scmp.ne.s32.totalorder %s127, %s128
      %p142 = scmp.eq.s32.totalorder %s21, 4
      %p143 = por %p141, %p142
      %p145 = scmp.ne.s32.totalorder %s128, %s144
      %p146 = scmp.eq.s32.totalorder %s21, 0
      %p147 = por %p145, %p146
      %s149 = sadd.s32 %s148, 1
      %p152 = scmp.eq.s32.totalorder %s15, 4
      %p153 = scmp.ne.s32.totalorder %s148, %s150
      %p154 = scmp.eq.s32.totalorder %s15, 0
      %p155 = por %p153, %p154
      %p156 = scmp.ne.s32.totalorder %s148, %s150
      %p157 = scmp.eq.s32.totalorder %s20, 4
      %p158 = por %p156, %p157
      %p159 = scmp.ne.s32.totalorder %s150, %s151
      %p160 = scmp.eq.s32.totalorder %s20, 0
      %p161 = por %p159, %p160
      %p162 = scmp.ne.s32.totalorder %s150, %s151
      %p163 = scmp.eq.s32.totalorder %s21, 4
      %p164 = por %p162, %p163
      %p166 = scmp.ne.s32.totalorder %s151, %s165
      %p167 = scmp.eq.s32.totalorder %s21, 0
      %p168 = por %p166, %p167
      %s169 = ssub.s32 %s15, %s22
      %p170 = scmp.eq.s32.totalorder %s169, 0
      %s172 = sadd.s32 %s171, 1
      %s173 = scalar_select %p170, %s171, %s172
      %p176 = pneg %p170
      %p177 = scmp.eq.s32.totalorder %s15, 4
      %p178 = por %p176, %p177
      %p179 = scmp.ne.s32.totalorder %s171, %s174
      %p180 = scmp.eq.s32.totalorder %s15, 0
      %p181 = por %p179, %p180
      %p182 = scmp.ne.s32.totalorder %s171, %s174
      %p183 = scmp.eq.s32.totalorder %s20, 4
      %p184 = por %p182, %p183
      %p185 = scmp.ne.s32.totalorder %s174, %s175
      %p186 = scmp.eq.s32.totalorder %s20, 0
      %p187 = por %p185, %p186
      %p188 = scmp.ne.s32.totalorder %s174, %s175
      %p189 = scmp.eq.s32.totalorder %s21, 4
      %p190 = por %p188, %p189
      %p192 = scmp.ne.s32.totalorder %s175, %s191
      %p193 = scmp.eq.s32.totalorder %s21, 0
      %p194 = por %p192, %p193
      %p195 = scmp.le.s32.totalorder 1, %s15
      %p196 = scmp.lt.s32.totalorder %s15, 6
      %p197 = pnand %p195, %p196
      %p198 = pneg %p197
      // Predicated region
      $region9: #{tpu_custom_call.1} parent=5 // pred_check
        _
      $region10: #{tpu_custom_call.1} parent=5 // pred_check_branch
        %200 = sbr.rel (%p197) target = $region12
      $region11: #{tpu_custom_call.1} parent=5 // pred_region
        %s201 = ssub.s32 %s15, 1
        // Predicated region
        $region13: #{tpu_custom_call.1} parent=11 // pred_check
          %p202 = pneg %p88
        $region14: #{tpu_custom_call.1} parent=11 // pred_check_branch
          %204 = sbr.rel (%p202) target = $region16
        $region15: #{tpu_custom_call.1} parent=11 // pred_region
          _
        $region16: #{tpu_custom_call.1} parent=11 // pred_fallthru
          _
        // Predicated region
        $region17: #{tpu_custom_call.1} parent=11 // pred_check
          %p205 = pneg %p161
        $region18: #{tpu_custom_call.1} parent=11 // pred_check_branch
          %207 = sbr.rel (%p205) target = $region20
        $region19: #{tpu_custom_call.1} parent=11 // pred_region
          _
        $region20: #{tpu_custom_call.1} parent=11 // pred_fallthru
          _
      $region12: #{tpu_custom_call.1} parent=5 // pred_fallthru
        _
      %p208 = scmp.lt.s32.totalorder %s15, 5
      // Predicated region
      $region21: #{tpu_custom_call.1} parent=5 // pred_check
        %p209 = pneg %p208
      $region22: #{tpu_custom_call.1} parent=5 // pred_check_branch
        %211 = sbr.rel (%p209) target = $region24
      $region23: #{tpu_custom_call.1} parent=5 // pred_region
        // Predicated region
        $region25: #{tpu_custom_call.1} parent=23 // pred_check
          %p212 = pneg %p35
        $region26: #{tpu_custom_call.1} parent=23 // pred_check_branch
          %214 = sbr.rel (%p212) target = $region28
        $region27: #{tpu_custom_call.1} parent=23 // pred_region
          %p215 = scmp.lt.s32.totalorder %s15, 4
          %s216 = scalar_select %p215, %s15, 4
          %s217 = smul.addr %s216, 8
          %s218 = scalar_lea.vmem %s0, %s217
        $region28: #{tpu_custom_call.1} parent=23 // pred_fallthru
          _
        // Predicated region
        $region29: #{tpu_custom_call.1} parent=23 // pred_check
          %p219 = pneg %p61
        $region30: #{tpu_custom_call.1} parent=23 // pred_check_branch
          %221 = sbr.rel (%p219) target = $region32
        $region31: #{tpu_custom_call.1} parent=23 // pred_region
          %p222 = scmp.lt.s32.totalorder %s15, 4
          %s223 = scalar_select %p222, %s15, 4
          %s224 = smul.addr %s223, 2
          %s225 = smul.addr %s224, 8
          %s226 = scalar_lea.vmem %s1, %s225
        $region32: #{tpu_custom_call.1} parent=23 // pred_fallthru
          _
        // Predicated region
        $region33: #{tpu_custom_call.1} parent=23 // pred_check
          %p227 = pneg %p108
        $region34: #{tpu_custom_call.1} parent=23 // pred_check_branch
          %229 = sbr.rel (%p227) target = $region36
        $region35: #{tpu_custom_call.1} parent=23 // pred_region
          %p230 = scmp.lt.s32.totalorder %s15, 4
          %s231 = scalar_select %p230, %s15, 4
          %s232 = smul.addr %s231, 8
          %s233 = scalar_lea.vmem %s3, %s232
        $region36: #{tpu_custom_call.1} parent=23 // pred_fallthru
          _
        // Predicated region
        $region37: #{tpu_custom_call.1} parent=23 // pred_check
          %p234 = pneg %p134
        $region38: #{tpu_custom_call.1} parent=23 // pred_check_branch
          %236 = sbr.rel (%p234) target = $region40
        $region39: #{tpu_custom_call.1} parent=23 // pred_region
          %s237 = sand.u32 %s124, 1
          %s238 = scalar_lea.sflag [#allocation3], %s237
          %s239 = sand.u32 %s124, 1
          %s240 = scalar_lea.vmem [#allocation2], %s239
          %242 = vsyncadd %s238, 0
          %s243 = scalar_lea.hbm %s4, %s15
          %s245 = sshll.u32 %s243, 4
          %s246 = int_to_ptr.hbm [resolvable:$true] %s245
          %s247 = sshll.u32 %s240, 4
          %s248 = int_to_ptr.vmem [resolvable:$true] %s247
          %250 = dma.hbm_to_vmem [thread:$0]  %s246, 16, %s248, %s238
        $region40: #{tpu_custom_call.1} parent=23 // pred_fallthru
          _
      $region24: #{tpu_custom_call.1} parent=5 // pred_fallthru
        _
      %p251 = scmp.le.s32.totalorder 1, %s15
      %p252 = scmp.lt.s32.totalorder %s15, 6
      %p253 = pnand %p251, %p252
      %p254 = pneg %p253
      // Predicated region
      $region41: #{tpu_custom_call.1} parent=5 // pred_check
        _
      $region42: #{tpu_custom_call.1} parent=5 // pred_check_branch
        %256 = sbr.rel (%p253) target = $region44
      $region43: #{tpu_custom_call.1} parent=5 // pred_region
        %s257 = ssub.s32 %s15, 1
        %s258 = sand.u32 %s127, 1
        %s259 = scalar_lea.sflag [#allocation3], %s258
        %s260 = sand.u32 %s127, 1
        %s261 = scalar_lea.vmem [#allocation2], %s260
        // Predicated region
        $region45: #{tpu_custom_call.1} parent=43 // pred_check
          %p262 = pneg %p140
        $region46: #{tpu_custom_call.1} parent=43 // pred_check_branch
          %264 = sbr.rel (%p262) target = $region48
        $region47: #{tpu_custom_call.1} parent=43 // pred_region
          %266 = dma.done %s259, 16
        $region48: #{tpu_custom_call.1} parent=43 // pred_fallthru
          _
        %p267 = scmp.lt.s32.totalorder %s20, 4
        %s268 = scalar_select %p267, %s20, 4
        %s269 = smul.addr %s268, 8
        %s270 = scalar_lea.vmem %s0, %s269
        %p271 = pneg %p41
        %p272 = pneg %p38
        %p273 = scmp.lt.s32.totalorder %s20, 4
        %s274 = scalar_select %p273, %s20, 4
        %s275 = smul.addr %s274, 2
        %s276 = smul.addr %s275, 8
        %s277 = scalar_lea.vmem %s1, %s276
        %p278 = pneg %p67
        %p279 = pneg %p64
        %p280 = pneg %p88
        %p281 = pneg %p85
        %p282 = scmp.lt.s32.totalorder %s20, 4
        %s283 = scalar_select %p282, %s20, 4
        %s284 = smul.addr %s283, 8
        %s285 = scalar_lea.vmem %s3, %s284
        %p286 = pneg %p114
        %p287 = pneg %p111
        %s288 = sand.u32 %s127, 1
        %s289 = scalar_lea.sflag [#allocation3], %s288
        %s290 = sand.u32 %s127, 1
        %s291 = scalar_lea.vmem [#allocation2], %s290
        %p292 = pneg %p140
        %p293 = pneg %p137
        %p294 = pneg %p161
        %p295 = pneg %p158
        %p296 = pneg %p187
        %p297 = pneg %p184
        %p298 = scmp.lt.s32.totalorder %s20, 4
        %s299 = scalar_select %p298, %s20, 4
        %s300 = smul.addr %s299, 8
        %s301 = scalar_lea.vmem %s6, %s300
        %p302 = scmp.lt.s32.totalorder %s20, 4
        %s303 = scalar_select %p302, %s20, 4
        %s304 = smul.addr %s303, 8
        %s305 = scalar_lea.vmem %s0, %s304
        %p306 = scmp.lt.s32.totalorder %s20, 4
        %s307 = scalar_select %p306, %s20, 4
        %s308 = smul.addr %s307, 2
        %s309 = smul.addr %s308, 8
        %s310 = scalar_lea.vmem %s1, %s309
        %p311 = scmp.lt.s32.totalorder %s20, 4
        %s312 = scalar_select %p311, %s20, 4
        %s313 = smul.addr %s312, 8
        %s314 = scalar_lea.vmem %s3, %s313
        %p315 = scmp.lt.s32.totalorder %s20, 4
        %s316 = scalar_select %p315, %s20, 4
        %s317 = smul.addr %s316, 8
        %s318 = scalar_lea.vmem %s6, %s317
        %v319 = vld [vmem:[%s305] sm:$0xff]
        %v320 = vld [vmem:[%s310] sm:$0xff]
        %v321 = vld [vmem:[%s310 + $0x8] sm:$0xff]
        %v322 = vld [vmem:[%s314] sm:$0xff]
        %v323 = vld [vmem:[%s261] sm:$0x1]
        %v324 = vld [vmem:[%s5] sm:$0x1]
        %v325 = vld [vmem:[%s2] sm:$0xff]
        %v326 = vld [vmem:[%s2 + $0x8] sm:$0xff]
        %v327 = vld [vmem:[%s2 + $0x10] sm:$0xff]
        %v328 = vld [vmem:[%s2 + $0x18] sm:$0xff]
        %v329 = vperm.slane %v319, 0
        %v330 = vlaneseq
        %v331 = vshrl.u32 %v330, 7
        %333 = vset.pattern.permute.xlu0 %v331
        %334 = vperm.xlu0 %333, %v329
        %v335 = vpop.permute.xlu0 %334
        %v336 = vlaneseq
        %v337 = vshrl.u32 %v336, 7
        %v338 = vadd.s32 %v337, 8
        %339 = vset.pattern.permute.xlu0 %v338
        %340 = vperm.xlu0 %339, %v329
        %v341 = vpop.permute.xlu0 %340
        %v342 = vlaneseq
        %v343 = vshrl.u32 %v342, 7
        %v344 = vadd.s32 %v343, 16
        %345 = vset.pattern.permute.xlu0 %v344
        %346 = vperm.xlu0 %345, %v329
        %v347 = vpop.permute.xlu0 %346
        %v348 = vlaneseq
        %v349 = vshrl.u32 %v348, 7
        %v350 = vadd.s32 %v349, 24
        %351 = vset.pattern.permute.xlu0 %v350
        %352 = vperm.xlu0 %351, %v329
        %v353 = vpop.permute.xlu0 %352
        %v354 = vperm.slane %v319, 1
        %v355 = vlaneseq
        %v356 = vshrl.u32 %v355, 7
        %358 = vset.pattern.permute.xlu0 %v356
        %359 = vperm.xlu0 %358, %v354
        %v360 = vpop.permute.xlu0 %359
        %v361 = vlaneseq
        %v362 = vshrl.u32 %v361, 7
        %v363 = vadd.s32 %v362, 8
        %364 = vset.pattern.permute.xlu0 %v363
        %365 = vperm.xlu0 %364, %v354
        %v366 = vpop.permute.xlu0 %365
        %v367 = vlaneseq
        %v368 = vshrl.u32 %v367, 7
        %v369 = vadd.s32 %v368, 16
        %370 = vset.pattern.permute.xlu0 %v369
        %371 = vperm.xlu0 %370, %v354
        %v372 = vpop.permute.xlu0 %371
        %v373 = vlaneseq
        %v374 = vshrl.u32 %v373, 7
        %v375 = vadd.s32 %v374, 24
        %376 = vset.pattern.permute.xlu0 %v375
        %377 = vperm.xlu0 %376, %v354
        %v378 = vpop.permute.xlu0 %377
        %v379 = vperm.slane %v319, 2
        %v380 = vlaneseq
        %v381 = vshrl.u32 %v380, 7
        %383 = vset.pattern.permute.xlu0 %v381
        %384 = vperm.xlu0 %383, %v379
        %v385 = vpop.permute.xlu0 %384
        %v386 = vlaneseq
        %v387 = vshrl.u32 %v386, 7
        %v388 = vadd.s32 %v387, 8
        %389 = vset.pattern.permute.xlu0 %v388
        %390 = vperm.xlu0 %389, %v379
        %v391 = vpop.permute.xlu0 %390
        %v392 = vlaneseq
        %v393 = vshrl.u32 %v392, 7
        %v394 = vadd.s32 %v393, 16
        %395 = vset.pattern.permute.xlu0 %v394
        %396 = vperm.xlu0 %395, %v379
        %v397 = vpop.permute.xlu0 %396
        %v398 = vlaneseq
        %v399 = vshrl.u32 %v398, 7
        %v400 = vadd.s32 %v399, 24
        %401 = vset.pattern.permute.xlu0 %v400
        %402 = vperm.xlu0 %401, %v379
        %v403 = vpop.permute.xlu0 %402
        %v404 = vperm.slane %v319, 3
        %v405 = vlaneseq
        %v406 = vshrl.u32 %v405, 7
        %408 = vset.pattern.permute.xlu0 %v406
        %409 = vperm.xlu0 %408, %v404
        %v410 = vpop.permute.xlu0 %409
        %v411 = vlaneseq
        %v412 = vshrl.u32 %v411, 7
        %v413 = vadd.s32 %v412, 8
        %414 = vset.pattern.permute.xlu0 %v413
        %415 = vperm.xlu0 %414, %v404
        %v416 = vpop.permute.xlu0 %415
        %v417 = vlaneseq
        %v418 = vshrl.u32 %v417, 7
        %v419 = vadd.s32 %v418, 16
        %420 = vset.pattern.permute.xlu0 %v419
        %421 = vperm.xlu0 %420, %v404
        %v422 = vpop.permute.xlu0 %421
        %v423 = vlaneseq
        %v424 = vshrl.u32 %v423, 7
        %v425 = vadd.s32 %v424, 24
        %426 = vset.pattern.permute.xlu0 %v425
        %427 = vperm.xlu0 %426, %v404
        %v428 = vpop.permute.xlu0 %427
        %v429 = vperm.slane %v319, 4
        %v430 = vlaneseq
        %v431 = vshrl.u32 %v430, 7
        %433 = vset.pattern.permute.xlu0 %v431
        %434 = vperm.xlu0 %433, %v429
        %v435 = vpop.permute.xlu0 %434
        %v436 = vlaneseq
        %v437 = vshrl.u32 %v436, 7
        %v438 = vadd.s32 %v437, 8
        %439 = vset.pattern.permute.xlu0 %v438
        %440 = vperm.xlu0 %439, %v429
        %v441 = vpop.permute.xlu0 %440
        %v442 = vlaneseq
        %v443 = vshrl.u32 %v442, 7
        %v444 = vadd.s32 %v443, 16
        %445 = vset.pattern.permute.xlu0 %v444
        %446 = vperm.xlu0 %445, %v429
        %v447 = vpop.permute.xlu0 %446
        %v448 = vlaneseq
        %v449 = vshrl.u32 %v448, 7
        %v450 = vadd.s32 %v449, 24
        %451 = vset.pattern.permute.xlu0 %v450
        %452 = vperm.xlu0 %451, %v429
        %v453 = vpop.permute.xlu0 %452
        %v454 = vperm.slane %v319, 5
        %v455 = vlaneseq
        %v456 = vshrl.u32 %v455, 7
        %458 = vset.pattern.permute.xlu0 %v456
        %459 = vperm.xlu0 %458, %v454
        %v460 = vpop.permute.xlu0 %459
        %v461 = vlaneseq
        %v462 = vshrl.u32 %v461, 7
        %v463 = vadd.s32 %v462, 8
        %464 = vset.pattern.permute.xlu0 %v463
        %465 = vperm.xlu0 %464, %v454
        %v466 = vpop.permute.xlu0 %465
        %v467 = vlaneseq
        %v468 = vshrl.u32 %v467, 7
        %v469 = vadd.s32 %v468, 16
        %470 = vset.pattern.permute.xlu0 %v469
        %471 = vperm.xlu0 %470, %v454
        %v472 = vpop.permute.xlu0 %471
        %v473 = vlaneseq
        %v474 = vshrl.u32 %v473, 7
        %v475 = vadd.s32 %v474, 24
        %476 = vset.pattern.permute.xlu0 %v475
        %477 = vperm.xlu0 %476, %v454
        %v478 = vpop.permute.xlu0 %477
        %v479 = vperm.slane %v319, 6
        %v480 = vlaneseq
        %v481 = vshrl.u32 %v480, 7
        %483 = vset.pattern.permute.xlu0 %v481
        %484 = vperm.xlu0 %483, %v479
        %v485 = vpop.permute.xlu0 %484
        %v486 = vlaneseq
        %v487 = vshrl.u32 %v486, 7
        %v488 = vadd.s32 %v487, 8
        %489 = vset.pattern.permute.xlu0 %v488
        %490 = vperm.xlu0 %489, %v479
        %v491 = vpop.permute.xlu0 %490
        %v492 = vlaneseq
        %v493 = vshrl.u32 %v492, 7
        %v494 = vadd.s32 %v493, 16
        %495 = vset.pattern.permute.xlu0 %v494
        %496 = vperm.xlu0 %495, %v479
        %v497 = vpop.permute.xlu0 %496
        %v498 = vlaneseq
        %v499 = vshrl.u32 %v498, 7
        %v500 = vadd.s32 %v499, 24
        %501 = vset.pattern.permute.xlu0 %v500
        %502 = vperm.xlu0 %501, %v479
        %v503 = vpop.permute.xlu0 %502
        %v504 = vperm.slane %v319, 7
        %v505 = vlaneseq
        %v506 = vshrl.u32 %v505, 7
        %508 = vset.pattern.permute.xlu0 %v506
        %509 = vperm.xlu0 %508, %v504
        %v510 = vpop.permute.xlu0 %509
        %v511 = vlaneseq
        %v512 = vshrl.u32 %v511, 7
        %v513 = vadd.s32 %v512, 8
        %514 = vset.pattern.permute.xlu0 %v513
        %515 = vperm.xlu0 %514, %v504
        %v516 = vpop.permute.xlu0 %515
        %v517 = vlaneseq
        %v518 = vshrl.u32 %v517, 7
        %v519 = vadd.s32 %v518, 16
        %520 = vset.pattern.permute.xlu0 %v519
        %521 = vperm.xlu0 %520, %v504
        %v522 = vpop.permute.xlu0 %521
        %v523 = vlaneseq
        %v524 = vshrl.u32 %v523, 7
        %v525 = vadd.s32 %v524, 24
        %526 = vset.pattern.permute.xlu0 %v525
        %527 = vperm.xlu0 %526, %v504
        %v528 = vpop.permute.xlu0 %527
        %v529 = vsub.f32 %v335, %v325
        %v530 = vsub.f32 %v341, %v326
        %v531 = vsub.f32 %v347, %v327
        %v532 = vsub.f32 %v353, %v328
        %v533 = vsub.f32 %v360, %v325
        %v534 = vsub.f32 %v366, %v326
        %v535 = vsub.f32 %v372, %v327
        %v536 = vsub.f32 %v378, %v328
        %v537 = vsub.f32 %v385, %v325
        %v538 = vsub.f32 %v391, %v326
        %v539 = vsub.f32 %v397, %v327
        %v540 = vsub.f32 %v403, %v328
        %v541 = vsub.f32 %v410, %v325
        %v542 = vsub.f32 %v416, %v326
        %v543 = vsub.f32 %v422, %v327
        %v544 = vsub.f32 %v428, %v328
        %v545 = vsub.f32 %v435, %v325
        %v546 = vsub.f32 %v441, %v326
        %v547 = vsub.f32 %v447, %v327
        %v548 = vsub.f32 %v453, %v328
        %v549 = vsub.f32 %v460, %v325
        %v550 = vsub.f32 %v466, %v326
        %v551 = vsub.f32 %v472, %v327
        %v552 = vsub.f32 %v478, %v328
        %v553 = vsub.f32 %v485, %v325
        %v554 = vsub.f32 %v491, %v326
        %v555 = vsub.f32 %v497, %v327
        %v556 = vsub.f32 %v503, %v328
        %v557 = vsub.f32 %v510, %v325
        %v558 = vsub.f32 %v516, %v326
        %v559 = vsub.f32 %v522, %v327
        %v560 = vsub.f32 %v528, %v328
        %v561 = vadd.f32 %v529, 1e-06
        %v562 = vadd.f32 %v530, 1e-06
        %v563 = vadd.f32 %v531, 1e-06
        %v564 = vadd.f32 %v532, 1e-06
        %v565 = vadd.f32 %v533, 1e-06
        %v566 = vadd.f32 %v534, 1e-06
        %v567 = vadd.f32 %v535, 1e-06
        %v568 = vadd.f32 %v536, 1e-06
        %v569 = vadd.f32 %v537, 1e-06
        %v570 = vadd.f32 %v538, 1e-06
        %v571 = vadd.f32 %v539, 1e-06
        %v572 = vadd.f32 %v540, 1e-06
        %v573 = vadd.f32 %v541, 1e-06
        %v574 = vadd.f32 %v542, 1e-06
        %v575 = vadd.f32 %v543, 1e-06
        %v576 = vadd.f32 %v544, 1e-06
        %v577 = vadd.f32 %v545, 1e-06
        %v578 = vadd.f32 %v546, 1e-06
        %v579 = vadd.f32 %v547, 1e-06
        %v580 = vadd.f32 %v548, 1e-06
        %v581 = vadd.f32 %v549, 1e-06
        %v582 = vadd.f32 %v550, 1e-06
        %v583 = vadd.f32 %v551, 1e-06
        %v584 = vadd.f32 %v552, 1e-06
        %v585 = vadd.f32 %v553, 1e-06
        %v586 = vadd.f32 %v554, 1e-06
        %v587 = vadd.f32 %v555, 1e-06
        %v588 = vadd.f32 %v556, 1e-06
        %v589 = vadd.f32 %v557, 1e-06
        %v590 = vadd.f32 %v558, 1e-06
        %v591 = vadd.f32 %v559, 1e-06
        %v592 = vadd.f32 %v560, 1e-06
        %v593 = vand.u32 2147483647, %v561
        %v594 = vand.u32 2147483647, %v562
        %v595 = vand.u32 2147483647, %v563
        %v596 = vand.u32 2147483647, %v564
        %v597 = vand.u32 2147483647, %v565
        %v598 = vand.u32 2147483647, %v566
        %v599 = vand.u32 2147483647, %v567
        %v600 = vand.u32 2147483647, %v568
        %v601 = vand.u32 2147483647, %v569
        %v602 = vand.u32 2147483647, %v570
        %v603 = vand.u32 2147483647, %v571
        %v604 = vand.u32 2147483647, %v572
        %v605 = vand.u32 2147483647, %v573
        %v606 = vand.u32 2147483647, %v574
        %v607 = vand.u32 2147483647, %v575
        %v608 = vand.u32 2147483647, %v576
        %v609 = vand.u32 2147483647, %v577
        %v610 = vand.u32 2147483647, %v578
        %v611 = vand.u32 2147483647, %v579
        %v612 = vand.u32 2147483647, %v580
        %v613 = vand.u32 2147483647, %v581
        %v614 = vand.u32 2147483647, %v582
        %v615 = vand.u32 2147483647, %v583
        %v616 = vand.u32 2147483647, %v584
        %v617 = vand.u32 2147483647, %v585
        %v618 = vand.u32 2147483647, %v586
        %v619 = vand.u32 2147483647, %v587
        %v620 = vand.u32 2147483647, %v588
        %v621 = vand.u32 2147483647, %v589
        %v622 = vand.u32 2147483647, %v590
        %v623 = vand.u32 2147483647, %v591
        %v624 = vand.u32 2147483647, %v592
        %v625 = vadd.f32 %v593, %v594
        %v626 = vadd.f32 %v625, %v595
        %v627 = vadd.f32 %v626, %v596
        %v628 = vrot.slane %v627, 4
        %v629 = vadd.f32 %v627, %v628
        %v630 = vrot.slane %v629, 2
        %v631 = vadd.f32 %v629, %v630
        %v632 = vrot.slane %v631, 1
        %v633 = vadd.f32 %v631, %v632
        %v634 = vadd.f32 %v597, %v598
        %v635 = vadd.f32 %v634, %v599
        %v636 = vadd.f32 %v635, %v600
        %v637 = vrot.slane %v636, 4
        %v638 = vadd.f32 %v636, %v637
        %v639 = vrot.slane %v638, 2
        %v640 = vadd.f32 %v638, %v639
        %v641 = vrot.slane %v640, 1
        %v642 = vadd.f32 %v640, %v641
        %v643 = vadd.f32 %v601, %v602
        %v644 = vadd.f32 %v643, %v603
        %v645 = vadd.f32 %v644, %v604
        %v646 = vrot.slane %v645, 4
        %v647 = vadd.f32 %v645, %v646
        %v648 = vrot.slane %v647, 2
        %v649 = vadd.f32 %v647, %v648
        %v650 = vrot.slane %v649, 1
        %v651 = vadd.f32 %v649, %v650
        %v652 = vadd.f32 %v605, %v606
        %v653 = vadd.f32 %v652, %v607
        %v654 = vadd.f32 %v653, %v608
        %v655 = vrot.slane %v654, 4
        %v656 = vadd.f32 %v654, %v655
        %v657 = vrot.slane %v656, 2
        %v658 = vadd.f32 %v656, %v657
        %v659 = vrot.slane %v658, 1
        %v660 = vadd.f32 %v658, %v659
        %v661 = vadd.f32 %v609, %v610
        %v662 = vadd.f32 %v661, %v611
        %v663 = vadd.f32 %v662, %v612
        %v664 = vrot.slane %v663, 4
        %v665 = vadd.f32 %v663, %v664
        %v666 = vrot.slane %v665, 2
        %v667 = vadd.f32 %v665, %v666
        %v668 = vrot.slane %v667, 1
        %v669 = vadd.f32 %v667, %v668
        %v670 = vadd.f32 %v613, %v614
        %v671 = vadd.f32 %v670, %v615
        %v672 = vadd.f32 %v671, %v616
        %v673 = vrot.slane %v672, 4
        %v674 = vadd.f32 %v672, %v673
        %v675 = vrot.slane %v674, 2
        %v676 = vadd.f32 %v674, %v675
        %v677 = vrot.slane %v676, 1
        %v678 = vadd.f32 %v676, %v677
        %v679 = vadd.f32 %v617, %v618
        %v680 = vadd.f32 %v679, %v619
        %v681 = vadd.f32 %v680, %v620
        %v682 = vrot.slane %v681, 4
        %v683 = vadd.f32 %v681, %v682
        %v684 = vrot.slane %v683, 2
        %v685 = vadd.f32 %v683, %v684
        %v686 = vrot.slane %v685, 1
        %v687 = vadd.f32 %v685, %v686
        %v688 = vadd.f32 %v621, %v622
        %v689 = vadd.f32 %v688, %v623
        %v690 = vadd.f32 %v689, %v624
        %v691 = vrot.slane %v690, 4
        %v692 = vadd.f32 %v690, %v691
        %v693 = vrot.slane %v692, 2
        %v694 = vadd.f32 %v692, %v693
        %v695 = vrot.slane %v694, 1
        %v696 = vadd.f32 %v694, %v695
        %v697 = vadd.f32 %v633, 0.0
        %v698 = vadd.f32 %v642, 0.0
        %v699 = vadd.f32 %v651, 0.0
        %v700 = vadd.f32 %v660, 0.0
        %v701 = vadd.f32 %v669, 0.0
        %v702 = vadd.f32 %v678, 0.0
        %v703 = vadd.f32 %v687, 0.0
        %v704 = vadd.f32 %v696, 0.0
        %v706 = vrot.slane %v319, 1
        %v707 = vrot.slane %v319, 2
        %v708 = vrot.slane %v319, 3
        %v709 = vrot.slane %v319, 4
        %v710 = vrot.slane %v319, 5
        %v711 = vrot.slane %v319, 6
        %v712 = vrot.slane %v319, 7
        %v713 = vperm.slane %v319, 0
        %v714 = vperm.slane %v706, 0
        %v715 = vperm.slane %v707, 0
        %v716 = vperm.slane %v708, 0
        %v717 = vperm.slane %v709, 0
        %v718 = vperm.slane %v710, 0
        %v719 = vperm.slane %v711, 0
        %v720 = vperm.slane %v712, 0
        %v729 = vsub.f32 %v713, %v320
        %v730 = vsub.f32 %v713, %v321
        %v731 = vsub.f32 %v714, %v320
        %v732 = vsub.f32 %v714, %v321
        %v733 = vsub.f32 %v715, %v320
        %v734 = vsub.f32 %v715, %v321
        %v735 = vsub.f32 %v716, %v320
        %v736 = vsub.f32 %v716, %v321
        %v737 = vsub.f32 %v717, %v320
        %v738 = vsub.f32 %v717, %v321
        %v739 = vsub.f32 %v718, %v320
        %v740 = vsub.f32 %v718, %v321
        %v741 = vsub.f32 %v719, %v320
        %v742 = vsub.f32 %v719, %v321
        %v743 = vsub.f32 %v720, %v320
        %v744 = vsub.f32 %v720, %v321
        %v745 = vadd.f32 %v729, 1e-06
        %v746 = vadd.f32 %v730, 1e-06
        %v747 = vadd.f32 %v731, 1e-06
        %v748 = vadd.f32 %v732, 1e-06
        %v749 = vadd.f32 %v733, 1e-06
        %v750 = vadd.f32 %v734, 1e-06
        %v751 = vadd.f32 %v735, 1e-06
        %v752 = vadd.f32 %v736, 1e-06
        %v753 = vadd.f32 %v737, 1e-06
        %v754 = vadd.f32 %v738, 1e-06
        %v755 = vadd.f32 %v739, 1e-06
        %v756 = vadd.f32 %v740, 1e-06
        %v757 = vadd.f32 %v741, 1e-06
        %v758 = vadd.f32 %v742, 1e-06
        %v759 = vadd.f32 %v743, 1e-06
        %v760 = vadd.f32 %v744, 1e-06
        %v761 = vand.u32 2147483647, %v745
        %v762 = vand.u32 2147483647, %v746
        %v763 = vand.u32 2147483647, %v747
        %v764 = vand.u32 2147483647, %v748
        %v765 = vand.u32 2147483647, %v749
        %v766 = vand.u32 2147483647, %v750
        %v767 = vand.u32 2147483647, %v751
        %v768 = vand.u32 2147483647, %v752
        %v769 = vand.u32 2147483647, %v753
        %v770 = vand.u32 2147483647, %v754
        %v771 = vand.u32 2147483647, %v755
        %v772 = vand.u32 2147483647, %v756
        %v773 = vand.u32 2147483647, %v757
        %v774 = vand.u32 2147483647, %v758
        %v775 = vand.u32 2147483647, %v759
        %v776 = vand.u32 2147483647, %v760
        %vm777 = vcmask 261120
        %v778 = vsel %vm777, %v761, 0.0
        %779 = vadd.xlane.f32.xlu0 %v778
        %v780 = vpop.xlane.xlu0 %779
        %v781 = vsel %vm777, %v762, 0.0
        %782 = vadd.xlane.f32.xlu0 %v781
        %v783 = vpop.xlane.xlu0 %782
        %v784 = vsel %vm777, %v763, 0.0
        %785 = vadd.xlane.f32.xlu0 %v784
        %v786 = vpop.xlane.xlu0 %785
        %v787 = vsel %vm777, %v764, 0.0
        %788 = vadd.xlane.f32.xlu0 %v787
        %v789 = vpop.xlane.xlu0 %788
        %v790 = vsel %vm777, %v765, 0.0
        %791 = vadd.xlane.f32.xlu0 %v790
        %v792 = vpop.xlane.xlu0 %791
        %v793 = vsel %vm777, %v766, 0.0
        %794 = vadd.xlane.f32.xlu0 %v793
        %v795 = vpop.xlane.xlu0 %794
        %v796 = vsel %vm777, %v767, 0.0
        %797 = vadd.xlane.f32.xlu0 %v796
        %v798 = vpop.xlane.xlu0 %797
        %v799 = vsel %vm777, %v768, 0.0
        %800 = vadd.xlane.f32.xlu0 %v799
        %v801 = vpop.xlane.xlu0 %800
        %v802 = vsel %vm777, %v769, 0.0
        %803 = vadd.xlane.f32.xlu0 %v802
        %v804 = vpop.xlane.xlu0 %803
        %v805 = vsel %vm777, %v770, 0.0
        %806 = vadd.xlane.f32.xlu0 %v805
        %v807 = vpop.xlane.xlu0 %806
        %v808 = vsel %vm777, %v771, 0.0
        %809 = vadd.xlane.f32.xlu0 %v808
        %v810 = vpop.xlane.xlu0 %809
        %v811 = vsel %vm777, %v772, 0.0
        %812 = vadd.xlane.f32.xlu0 %v811
        %v813 = vpop.xlane.xlu0 %812
        %v814 = vsel %vm777, %v773, 0.0
        %815 = vadd.xlane.f32.xlu0 %v814
        %v816 = vpop.xlane.xlu0 %815
        %v817 = vsel %vm777, %v774, 0.0
        %818 = vadd.xlane.f32.xlu0 %v817
        %v819 = vpop.xlane.xlu0 %818
        %v820 = vsel %vm777, %v775, 0.0
        %821 = vadd.xlane.f32.xlu0 %v820
        %v822 = vpop.xlane.xlu0 %821
        %v823 = vsel %vm777, %v776, 0.0
        %824 = vadd.xlane.f32.xlu0 %v823
        %v825 = vpop.xlane.xlu0 %824
        %826 = vset.pattern.permute.xlu0 0
        %827 = vperm.xlu0 %826, %v322
        %v828 = vpop.permute.xlu0 %827
        %v829 = vperm.slane %v323, 0
        %vm830 = vcmp.eq.s32.totalorder %v828, %v829
        %v831 = vadd.f32 %v780, 1.0
        %v832 = vadd.f32 %v783, 1.0
        %v833 = vadd.f32 %v786, 1.0
        %v834 = vadd.f32 %v789, 1.0
        %v835 = vadd.f32 %v792, 1.0
        %v836 = vadd.f32 %v795, 1.0
        %v837 = vadd.f32 %v798, 1.0
        %v838 = vadd.f32 %v801, 1.0
        %v839 = vadd.f32 %v804, 1.0
        %v840 = vadd.f32 %v807, 1.0
        %v841 = vadd.f32 %v810, 1.0
        %v842 = vadd.f32 %v813, 1.0
        %v843 = vadd.f32 %v816, 1.0
        %v844 = vadd.f32 %v819, 1.0
        %v845 = vadd.f32 %v822, 1.0
        %v846 = vadd.f32 %v825, 1.0
        %v863 = vlaneseq
        %v864 = vand.u32 %v863, 127
        %v865 = vperm.slane %v831, %v864
        %v866 = vadd.s32 %v864, 4294967288
        %v867 = vperm.slane %v832, %v866
        %vm868 = vcmask 130112
        %v869 = vsel %vm868, %v867, %v865
        %v870 = vperm.slane %v833, %v864
        %v871 = vperm.slane %v834, %v866
        %v872 = vsel %vm868, %v871, %v870
        %v873 = vperm.slane %v835, %v864
        %v874 = vperm.slane %v836, %v866
        %v875 = vsel %vm868, %v874, %v873
        %v876 = vperm.slane %v837, %v864
        %v877 = vperm.slane %v838, %v866
        %v878 = vsel %vm868, %v877, %v876
        %v879 = vperm.slane %v839, %v864
        %v880 = vperm.slane %v840, %v866
        %v881 = vsel %vm868, %v880, %v879
        %v882 = vperm.slane %v841, %v864
        %v883 = vperm.slane %v842, %v866
        %v884 = vsel %vm868, %v883, %v882
        %v885 = vperm.slane %v843, %v864
        %v886 = vperm.slane %v844, %v866
        %v887 = vsel %vm868, %v886, %v885
        %v888 = vperm.slane %v845, %v864
        %v889 = vperm.slane %v846, %v866
        %v890 = vsel %vm868, %v889, %v888
        %vm891 = vcmask 1041409
        %v892 = vsel %vm891, %v872, %v869
        %vm893 = vcmask 1042434
        %v894 = vsel %vm893, %v875, %v892
        %vm895 = vcmask 1043459
        %v896 = vsel %vm895, %v878, %v894
        %vm897 = vcmask 1044484
        %v898 = vsel %vm897, %v881, %v896
        %vm899 = vcmask 1045509
        %v900 = vsel %vm899, %v884, %v898
        %vm901 = vcmask 1046534
        %v902 = vsel %vm901, %v887, %v900
        %vm903 = vcmask 1047559
        %v904 = vsel %vm903, %v890, %v902
        %v906 = vsel %vm830, %v904, -1e+30
        %vm907 = vcmp.ge.s32.totalorder %v324, 0
        %v908 = vperm.slane %v324, 0
        %vm909 = vcmp.ne.s32.totalorder %v828, %v908
        %v910 = vsel %vm907, 1, 0
        %v911 = vperm.slane %v910, 0
        %vm912 = vcmp.eq.s32.totalorder %v911, 1
        %vm913 = vmand %vm912, %vm909
        %v922 = vsel %vm891, %v698, %v697
        %v923 = vsel %vm893, %v699, %v922
        %v924 = vsel %vm895, %v700, %v923
        %v925 = vsel %vm897, %v701, %v924
        %v926 = vsel %vm899, %v702, %v925
        %v927 = vsel %vm901, %v703, %v926
        %v928 = vsel %vm903, %v704, %v927
        %v930 = vsel %vm913, %v928, 1e+30
        %v931 = vperm.slane %v906, 0
        %v932 = vlaneseq
        %v933 = vshrl.u32 %v932, 7
        %935 = vset.pattern.permute.xlu0 %v933
        %936 = vperm.xlu0 %935, %v931
        %v937 = vpop.permute.xlu0 %936
        %v938 = vlaneseq
        %v939 = vshrl.u32 %v938, 7
        %v940 = vadd.s32 %v939, 8
        %941 = vset.pattern.permute.xlu0 %v940
        %942 = vperm.xlu0 %941, %v931
        %v943 = vpop.permute.xlu0 %942
        %v944 = vperm.slane %v906, 1
        %v945 = vlaneseq
        %v946 = vshrl.u32 %v945, 7
        %948 = vset.pattern.permute.xlu0 %v946
        %949 = vperm.xlu0 %948, %v944
        %v950 = vpop.permute.xlu0 %949
        %v951 = vlaneseq
        %v952 = vshrl.u32 %v951, 7
        %v953 = vadd.s32 %v952, 8
        %954 = vset.pattern.permute.xlu0 %v953
        %955 = vperm.xlu0 %954, %v944
        %v956 = vpop.permute.xlu0 %955
        %v957 = vperm.slane %v906, 2
        %v958 = vlaneseq
        %v959 = vshrl.u32 %v958, 7
        %961 = vset.pattern.permute.xlu0 %v959
        %962 = vperm.xlu0 %961, %v957
        %v963 = vpop.permute.xlu0 %962
        %v964 = vlaneseq
        %v965 = vshrl.u32 %v964, 7
        %v966 = vadd.s32 %v965, 8
        %967 = vset.pattern.permute.xlu0 %v966
        %968 = vperm.xlu0 %967, %v957
        %v969 = vpop.permute.xlu0 %968
        %v970 = vperm.slane %v906, 3
        %v971 = vlaneseq
        %v972 = vshrl.u32 %v971, 7
        %974 = vset.pattern.permute.xlu0 %v972
        %975 = vperm.xlu0 %974, %v970
        %v976 = vpop.permute.xlu0 %975
        %v977 = vlaneseq
        %v978 = vshrl.u32 %v977, 7
        %v979 = vadd.s32 %v978, 8
        %980 = vset.pattern.permute.xlu0 %v979
        %981 = vperm.xlu0 %980, %v970
        %v982 = vpop.permute.xlu0 %981
        %v983 = vperm.slane %v906, 4
        %v984 = vlaneseq
        %v985 = vshrl.u32 %v984, 7
        %987 = vset.pattern.permute.xlu0 %v985
        %988 = vperm.xlu0 %987, %v983
        %v989 = vpop.permute.xlu0 %988
        %v990 = vlaneseq
        %v991 = vshrl.u32 %v990, 7
        %v992 = vadd.s32 %v991, 8
        %993 = vset.pattern.permute.xlu0 %v992
        %994 = vperm.xlu0 %993, %v983
        %v995 = vpop.permute.xlu0 %994
        %v996 = vperm.slane %v906, 5
        %v997 = vlaneseq
        %v998 = vshrl.u32 %v997, 7
        %1000 = vset.pattern.permute.xlu0 %v998
        %1001 = vperm.xlu0 %1000, %v996
        %v1002 = vpop.permute.xlu0 %1001
        %v1003 = vlaneseq
        %v1004 = vshrl.u32 %v1003, 7
        %v1005 = vadd.s32 %v1004, 8
        %1006 = vset.pattern.permute.xlu0 %v1005
        %1007 = vperm.xlu0 %1006, %v996
        %v1008 = vpop.permute.xlu0 %1007
        %v1009 = vperm.slane %v906, 6
        %v1010 = vlaneseq
        %v1011 = vshrl.u32 %v1010, 7
        %1013 = vset.pattern.permute.xlu0 %v1011
        %1014 = vperm.xlu0 %1013, %v1009
        %v1015 = vpop.permute.xlu0 %1014
        %v1016 = vlaneseq
        %v1017 = vshrl.u32 %v1016, 7
        %v1018 = vadd.s32 %v1017, 8
        %1019 = vset.pattern.permute.xlu0 %v1018
        %1020 = vperm.xlu0 %1019, %v1009
        %v1021 = vpop.permute.xlu0 %1020
        %v1022 = vperm.slane %v906, 7
        %v1023 = vlaneseq
        %v1024 = vshrl.u32 %v1023, 7
        %1026 = vset.pattern.permute.xlu0 %v1024
        %1027 = vperm.xlu0 %1026, %v1022
        %v1028 = vpop.permute.xlu0 %1027
        %v1029 = vlaneseq
        %v1030 = vshrl.u32 %v1029, 7
        %v1031 = vadd.s32 %v1030, 8
        %1032 = vset.pattern.permute.xlu0 %v1031
        %1033 = vperm.xlu0 %1032, %v1022
        %v1034 = vpop.permute.xlu0 %1033
        %v1036 = vrot.slane %v930, 1
        %v1037 = vrot.slane %v930, 2
        %v1038 = vrot.slane %v930, 3
        %v1039 = vrot.slane %v930, 4
        %v1040 = vrot.slane %v930, 5
        %v1041 = vrot.slane %v930, 6
        %v1042 = vrot.slane %v930, 7
        %v1043 = vperm.slane %v930, 0
        %v1044 = vperm.slane %v1036, 0
        %v1045 = vperm.slane %v1037, 0
        %v1046 = vperm.slane %v1038, 0
        %v1047 = vperm.slane %v1039, 0
        %v1048 = vperm.slane %v1040, 0
        %v1049 = vperm.slane %v1041, 0
        %v1050 = vperm.slane %v1042, 0
        %v1059 = vsub.f32 %v937, %v1043
        %v1060 = vsub.f32 %v943, %v1043
        %v1061 = vsub.f32 %v950, %v1044
        %v1062 = vsub.f32 %v956, %v1044
        %v1063 = vsub.f32 %v963, %v1045
        %v1064 = vsub.f32 %v969, %v1045
        %v1065 = vsub.f32 %v976, %v1046
        %v1066 = vsub.f32 %v982, %v1046
        %v1067 = vsub.f32 %v989, %v1047
        %v1068 = vsub.f32 %v995, %v1047
        %v1069 = vsub.f32 %v1002, %v1048
        %v1070 = vsub.f32 %v1008, %v1048
        %v1071 = vsub.f32 %v1015, %v1049
        %v1072 = vsub.f32 %v1021, %v1049
        %v1073 = vsub.f32 %v1028, %v1050
        %v1074 = vsub.f32 %v1034, %v1050
        %v1075 = vmax.f32 %v1059, 0.0
        %v1076 = vmax.f32 %v1060, 0.0
        %v1077 = vmax.f32 %v1061, 0.0
        %v1078 = vmax.f32 %v1062, 0.0
        %v1079 = vmax.f32 %v1063, 0.0
        %v1080 = vmax.f32 %v1064, 0.0
        %v1081 = vmax.f32 %v1065, 0.0
        %v1082 = vmax.f32 %v1066, 0.0
        %v1083 = vmax.f32 %v1067, 0.0
        %v1084 = vmax.f32 %v1068, 0.0
        %v1085 = vmax.f32 %v1069, 0.0
        %v1086 = vmax.f32 %v1070, 0.0
        %v1087 = vmax.f32 %v1071, 0.0
        %v1088 = vmax.f32 %v1072, 0.0
        %v1089 = vmax.f32 %v1073, 0.0
        %v1090 = vmax.f32 %v1074, 0.0
        %1091 = vadd.xlane.f32.xlu0 %v1075
        %v1092 = vpop.xlane.xlu0 %1091
        %1093 = vadd.xlane.f32.xlu0 %v1076
        %v1094 = vpop.xlane.xlu0 %1093
        %1095 = vadd.xlane.f32.xlu0 %v1077
        %v1096 = vpop.xlane.xlu0 %1095
        %1097 = vadd.xlane.f32.xlu0 %v1078
        %v1098 = vpop.xlane.xlu0 %1097
        %1099 = vadd.xlane.f32.xlu0 %v1079
        %v1100 = vpop.xlane.xlu0 %1099
        %1101 = vadd.xlane.f32.xlu0 %v1080
        %v1102 = vpop.xlane.xlu0 %1101
        %1103 = vadd.xlane.f32.xlu0 %v1081
        %v1104 = vpop.xlane.xlu0 %1103
        %1105 = vadd.xlane.f32.xlu0 %v1082
        %v1106 = vpop.xlane.xlu0 %1105
        %1107 = vadd.xlane.f32.xlu0 %v1083
        %v1108 = vpop.xlane.xlu0 %1107
        %1109 = vadd.xlane.f32.xlu0 %v1084
        %v1110 = vpop.xlane.xlu0 %1109
        %1111 = vadd.xlane.f32.xlu0 %v1085
        %v1112 = vpop.xlane.xlu0 %1111
        %1113 = vadd.xlane.f32.xlu0 %v1086
        %v1114 = vpop.xlane.xlu0 %1113
        %1115 = vadd.xlane.f32.xlu0 %v1087
        %v1116 = vpop.xlane.xlu0 %1115
        %1117 = vadd.xlane.f32.xlu0 %v1088
        %v1118 = vpop.xlane.xlu0 %1117
        %1119 = vadd.xlane.f32.xlu0 %v1089
        %v1120 = vpop.xlane.xlu0 %1119
        %1121 = vadd.xlane.f32.xlu0 %v1090
        %v1122 = vpop.xlane.xlu0 %1121
        %v1123 = vadd.f32 %v1092, 0.0
        %v1124 = vadd.f32 %v1094, 0.0
        %v1125 = vadd.f32 %v1096, 0.0
        %v1126 = vadd.f32 %v1098, 0.0
        %v1127 = vadd.f32 %v1100, 0.0
        %v1128 = vadd.f32 %v1102, 0.0
        %v1129 = vadd.f32 %v1104, 0.0
        %v1130 = vadd.f32 %v1106, 0.0
        %v1131 = vadd.f32 %v1108, 0.0
        %v1132 = vadd.f32 %v1110, 0.0
        %v1133 = vadd.f32 %v1112, 0.0
        %v1134 = vadd.f32 %v1114, 0.0
        %v1135 = vadd.f32 %v1116, 0.0
        %v1136 = vadd.f32 %v1118, 0.0
        %v1137 = vadd.f32 %v1120, 0.0
        %v1138 = vadd.f32 %v1122, 0.0
        %v1155 = vperm.slane %v1123, %v864
        %v1156 = vperm.slane %v1124, %v866
        %v1157 = vsel %vm868, %v1156, %v1155
        %v1158 = vperm.slane %v1125, %v864
        %v1159 = vperm.slane %v1126, %v866
        %v1160 = vsel %vm868, %v1159, %v1158
        %v1161 = vperm.slane %v1127, %v864
        %v1162 = vperm.slane %v1128, %v866
        %v1163 = vsel %vm868, %v1162, %v1161
        %v1164 = vperm.slane %v1129, %v864
        %v1165 = vperm.slane %v1130, %v866
        %v1166 = vsel %vm868, %v1165, %v1164
        %v1167 = vperm.slane %v1131, %v864
        %v1168 = vperm.slane %v1132, %v866
        %v1169 = vsel %vm868, %v1168, %v1167
        %v1170 = vperm.slane %v1133, %v864
        %v1171 = vperm.slane %v1134, %v866
        %v1172 = vsel %vm868, %v1171, %v1170
        %v1173 = vperm.slane %v1135, %v864
        %v1174 = vperm.slane %v1136, %v866
        %v1175 = vsel %vm868, %v1174, %v1173
        %v1176 = vperm.slane %v1137, %v864
        %v1177 = vperm.slane %v1138, %v866
        %v1178 = vsel %vm868, %v1177, %v1176
        %v1179 = vsel %vm891, %v1160, %v1157
        %v1180 = vsel %vm893, %v1163, %v1179
        %v1181 = vsel %vm895, %v1166, %v1180
        %v1182 = vsel %vm897, %v1169, %v1181
        %v1183 = vsel %vm899, %v1172, %v1182
        %v1184 = vsel %vm901, %v1175, %v1183
        %v1185 = vsel %vm903, %v1178, %v1184
        %vm1187 = vcmask 130048
        %1188 = vst.msk [vmem:[%s318] sm:$0xff] %vm1187, %v1185
        %p1189 = scmp.lt.s32.totalorder %s20, 4
        %s1190 = scalar_select %p1189, %s20, 4
        %s1191 = smul.addr %s1190, 8
        %s1192 = scalar_lea.vmem %s6, %s1191
        // Predicated region
        $region49: #{tpu_custom_call.1} parent=43 // pred_check
          %p1193 = pneg %p184
        $region50: #{tpu_custom_call.1} parent=43 // pred_check_branch
          %1195 = sbr.rel (%p1193) target = $region52
        $region51: #{tpu_custom_call.1} parent=43 // pred_region
          _
        $region52: #{tpu_custom_call.1} parent=43 // pred_fallthru
          _
      $region44: #{tpu_custom_call.1} parent=5 // pred_fallthru
        _
      %p1196 = scmp.le.s32.totalorder 2, %s15
      // Predicated region
      $region53: #{tpu_custom_call.1} parent=5 // pred_check
        %p1197 = pneg %p1196
      $region54: #{tpu_custom_call.1} parent=5 // pred_check_branch
        %1199 = sbr.rel (%p1197) target = $region56
      $region55: #{tpu_custom_call.1} parent=5 // pred_region
        %s1200 = ssub.s32 %s15, 2
        // Predicated region
        $region57: #{tpu_custom_call.1} parent=55 // pred_check
          %p1201 = pneg %p190
        $region58: #{tpu_custom_call.1} parent=55 // pred_check_branch
          %1203 = sbr.rel (%p1201) target = $region60
        $region59: #{tpu_custom_call.1} parent=55 // pred_region
          %p1204 = scmp.lt.s32.totalorder %s21, 4
          %s1205 = scalar_select %p1204, %s21, 4
          %s1206 = smul.addr %s1205, 8
          %s1207 = scalar_lea.vmem %s6, %s1206
        $region60: #{tpu_custom_call.1} parent=55 // pred_fallthru
          _
      $region56: #{tpu_custom_call.1} parent=5 // pred_fallthru
        _
    $region6: #{tpu_custom_call.1} parent=1 // loop_footer
      %s19 = sadd.s32 1, %s15
    $region7: #{tpu_custom_call.1} parent=1 // loop_footer_branch
      %14 = sbr.rel target = $region3
    $region8: #{tpu_custom_call.1} parent=1 // loop_exit
      _
    %1208 = vsyncpa [#allocation3], 1
    %s1209 = scalar_lea.sflag [#allocation3], 1
    %1210 = vsyncpa %s1209, 1

</llo_original>
